<compile_context>
chip_gen: v7x
topology: tpu7x:2x2x1
jax: 0.10.0
libtpu: 0.0.40
codegen_flags: <defaults>
</compile_context>

<pallas_src>
import jax
import jax.numpy as jnp
from jax.experimental import pallas as pl
from jax.experimental.pallas import tpu as pltpu

_MAX_DMA_CHUNKS = 8          # max outstanding HBM->HBM DMAs
_MIN_CHUNK_BYTES = 1 << 20   # don't bother chunking below ~1 MiB per chunk


def _make_identity_dma_kernel(chunks, total_rows):
    """Build a kernel that copies `chunks` ((start, rows) along axis 0, static
    Python ints) of the input HBM ref directly into the output HBM ref."""
    single_full = len(chunks) == 1 and chunks[0] == (0, total_rows)

    def kernel(x_hbm, o_hbm, sem):
        if single_full:
            # Whole-array HBM->HBM DMA: one descriptor, no slicing.
            cp = pltpu.make_async_copy(x_hbm, o_hbm, sem.at[0])
            cp.start()
            cp.wait()
            return
        copies = []
        for i, (start, rows) in enumerate(chunks):
            cp = pltpu.make_async_copy(
                x_hbm.at[pl.ds(start, rows)],
                o_hbm.at[pl.ds(start, rows)],
                sem.at[i],
            )
            cp.start()  # several DMAs in flight at once
            copies.append(cp)
        for cp in copies:
            cp.wait()

    return kernel


def identity_pallas(x: jax.Array) -> jax.Array:
    """Materialized identity: returns a fresh copy of x (same shape/dtype)
    produced by direct HBM->HBM DMA inside a Pallas kernel."""
    if x.size == 0:
        # Nothing to move; still hand back a fresh buffer for consistency.
        return jnp.copy(x)

    orig_shape = x.shape
    xk = x.reshape(1) if x.ndim == 0 else x   # 0-d -> (1,) view (free)

    rows = xk.shape[0]
    nbytes = xk.size * jnp.dtype(xk.dtype).itemsize

    # Up to _MAX_DMA_CHUNKS outstanding DMAs, each >= _MIN_CHUNK_BYTES, never
    # more chunks than leading-dim rows.  Small tensors -> a single DMA.
    n_chunks = int(max(1, min(_MAX_DMA_CHUNKS, rows, nbytes // _MIN_CHUNK_BYTES)))
    rows_per = -(-rows // n_chunks)                     # ceil divide
    if rows >= 8 * n_chunks:
        rows_per = -(-rows_per // 8) * 8                # friendly boundaries

    chunks = []
    start = 0
    while start < rows:
        size = min(rows_per, rows - start)
        chunks.append((start, size))
        start += size
    chunks = tuple(chunks)

    out = pl.pallas_call(
        _make_identity_dma_kernel(chunks, rows),
        out_shape=jax.ShapeDtypeStruct(xk.shape, xk.dtype),
        in_specs=[pl.BlockSpec(memory_space=pl.ANY)],
        out_specs=pl.BlockSpec(memory_space=pl.ANY),
        scratch_shapes=[pltpu.SemaphoreType.DMA((len(chunks),))],
        cost_estimate=pl.CostEstimate(
            flops=0, transcendentals=0, bytes_accessed=2 * nbytes),
    )(xk)

    return out.reshape(orig_shape)


class IdentityPallas:
    """JAX/Pallas equivalent of the PyTorch Identity module (no parameters).

    forward(inputs, masks) -> inputs[0].  The semantically optimal path is the
    zero-copy pass-through (materialize_copy=False); the Pallas HBM->HBM DMA
    copy is used when a materialized fresh buffer is required.
    """

    def __init__(self, __C=None, *, materialize_copy=True):
        # Mirrors Identity.__init__(self, __C): configuration is unused.
        self.materialize_copy = materialize_copy

    def __call__(self, inputs, masks):
        x = inputs[0]
        if not self.materialize_copy:
            return x  # identity is semantically free: no HBM traffic at all
        return identity_pallas(x)


if __name__ == "__main__":
    key = jax.random.PRNGKey(0)
    k0, k1, km, k2 = jax.random.split(key, 4)

    # Small NCHW-style inputs; `inputs` is a sequence, module returns inputs[0].
    x0 = jax.random.normal(k0, (2, 4, 16, 16), dtype=jnp.float32)
    x1 = jax.random.normal(k1, (2, 4, 16, 16), dtype=jnp.float32)
    masks = jax.random.normal(km, (2, 1, 16, 16), dtype=jnp.float32)

    module = IdentityPallas(None)  # positional config, like Identity(__C)
    out = jax.block_until_ready(module([x0, x1], masks))
    assert out.shape == x0.shape and out.dtype == x0.dtype
    assert bool(jnp.all(out == x0))

    # Robustness check: odd-length 1-D input (the old narrow-lane fallback case);
    # DMA copy does not care about 128-divisibility.
    v = jax.random.normal(k2, (1000,), dtype=jnp.float32)
    vo = jax.block_until_ready(identity_pallas(v))
    assert vo.shape == v.shape and vo.dtype == v.dtype
    assert bool(jnp.all(vo == v))

    print("KERNEL_OK")
</pallas_src>

<mosaic_0001>
module attributes {stable_mosaic.version = 11 : i64} {
  func.func @kernel(%arg0: memref<2x4x16x16xf32, #tpu.memory_space<any>>, %arg1: memref<2x4x16x16xf32, #tpu.memory_space<any>>, %arg2: memref<1x!tpu.dma_semaphore, #tpu.memory_space<semaphore_mem>>) attributes {dimension_semantics = [], scalar_prefetch = 0 : i64, scratch_operands = 1 : i64, tpu.core_type = #tpu.core_type<tc>} {
    %c0_i32 = arith.constant 0 : i32
    %0 = tpu.memref_slice %arg2[%c0_i32] : memref<1x!tpu.dma_semaphore, #tpu.memory_space<semaphore_mem>> -> memref<1x!tpu.dma_semaphore, #tpu.memory_space<semaphore_mem>>
    %1 = tpu.memref_squeeze %0 : memref<1x!tpu.dma_semaphore, #tpu.memory_space<semaphore_mem>> -> memref<!tpu.dma_semaphore, #tpu.memory_space<semaphore_mem>>
    tpu.enqueue_dma source(%arg0 : memref<2x4x16x16xf32, #tpu.memory_space<any>>) target(%arg1 : memref<2x4x16x16xf32, #tpu.memory_space<any>>) target_semaphore(%1 : memref<!tpu.dma_semaphore, #tpu.memory_space<semaphore_mem>>)
    %c0_i32_0 = arith.constant 0 : i32
    %2 = tpu.memref_slice %arg2[%c0_i32_0] : memref<1x!tpu.dma_semaphore, #tpu.memory_space<semaphore_mem>> -> memref<1x!tpu.dma_semaphore, #tpu.memory_space<semaphore_mem>>
    %3 = tpu.memref_squeeze %2 : memref<1x!tpu.dma_semaphore, #tpu.memory_space<semaphore_mem>> -> memref<!tpu.dma_semaphore, #tpu.memory_space<semaphore_mem>>
    tpu.wait_dma2 semaphore(%3 : memref<!tpu.dma_semaphore, #tpu.memory_space<semaphore_mem>>) src(%arg0 : memref<2x4x16x16xf32, #tpu.memory_space<any>>) dst(%arg1 : memref<2x4x16x16xf32, #tpu.memory_space<any>>)
    return
  }
}

</mosaic_0001>

<llo_original>
// kernel: tpu_custom_call.1
$region0: #{tpu_custom_call.1}
  #allocation0 [shape = 'u32[]', space=smem, size = 0x4, offset = 0x4, fixed_abs, tag = 'smem constant byte address 0x4 - core index']
  #allocation1 [shape = 'u32[144,128]{1,0:T(1,128)}', space=vmem, size = 0x12000, scoped, tag = 'internal scratch']
  #allocation2 [shape = 's32[1]{0}', space=sflag, size = 0x4, scoped, tag = 'scratch operand']
  #allocation3 [shape = 's32[]', space=sflag, size = 0x4, offset = 0, fixed_abs, tag = 'sflag constant byte address 0x0 - dummy sync flag']
  #allocation4 [shape = 'u32[0]{0}', space=smem, size = 0, offset = 0, fixed_abs, tag = 'smem constant byte address 0x0 - null']
  %s0 = inlined_call_operand.hbm [shape: f32[2,4,16,16], index: 0, kind: input, shape index: {}]
  %s1 = inlined_call_operand.hbm [shape: f32[2,4,16,16], index: 1, kind: output, shape index: {}]
  %s2 = sld [smem:[#allocation0]]
  $region2: #{tpu_custom_call.1} parent=0
    _
  %s4 = ssub.s32 1, %s2
  %s5 = scalar_select 0, %s4, %s2
  %s7 = sshll.u32 1, 14
  %s8 = sxor.u32 4294967295, %s7
  %s11 = sshll.u32 3, 24
  %s12 = sxor.u32 4294967295, %s11
  %s13 = sand.u32 0, %s12
  %s15 = sor.u32 %s13, 0
  %18 = dma.general %s0, 2048, %s1, [#allocation2], [#allocation3], [#allocation4], %s15, 0
  %s19 = smul.u32 2, 4
  %s20 = smul.u32 %s19, 16
  %s21 = smul.u32 %s20, 1
  %s22 = sshll.u32 %s21, 4
  %23 = dma.done [#allocation2], %s22
  %24 = vsyncmov [#allocation2]
  %s25 = vpop.sfrf %24
  %p26 = scmp.eq.s32.totalorder %s25, 0
  %p27 = pneg %p26
  %29 = shalt.err (%p27)

</llo_original>
